<compile_context>
chip_gen: v7x
topology: tpu7x:2x2x1
jax: 0.10.0
libtpu: 0.0.40
codegen_flags: <defaults>
</compile_context>

<pallas_src>
import functools

import jax
import jax.numpy as jnp
import numpy as np
from jax.experimental import pallas as pl
from jax.experimental.pallas import tpu as pltpu


# --------------------------------------------------------------------- sphere
def _trig_tables(H, W):
    """1-D trig tables behind EPC.xyz_sphere.

    Returns cos_t, sin_t of shape (H, 1) and cos_p, sin_p of shape (1, W),
    all float32.  The full (3, H, W) sphere is reconstructed inside the kernel.
    """
    assert H >= 2 and W >= 2, "xyz_sphere requires H >= 2 and W >= 2 (divides by H-1, W-1)"
    i = jnp.arange(H, dtype=jnp.float32)
    j = jnp.arange(W, dtype=jnp.float32)
    theta = -jnp.pi * (i / float(H - 1) - 0.5)          # (H,)
    phi = jnp.pi * (2.0 * j / float(W - 1) - 1.0)       # (W,)
    cos_t = jnp.cos(theta).reshape(H, 1).astype(jnp.float32)
    sin_t = jnp.sin(theta).reshape(H, 1).astype(jnp.float32)
    cos_p = jnp.cos(phi).reshape(1, W).astype(jnp.float32)
    sin_p = jnp.sin(phi).reshape(1, W).astype(jnp.float32)
    return cos_t, sin_t, cos_p, sin_p


def xyz_sphere(H, W, YZ_swap=False):
    """JAX mirror of EPC.xyz_sphere: (3, H, W) float32 unit-sphere directions."""
    cos_t, sin_t, cos_p, sin_p = _trig_tables(H, W)
    if YZ_swap:
        p0 = cos_p * cos_t
        p1 = -sin_t * jnp.ones_like(cos_p)
        p2 = sin_p * cos_t
    else:
        p0 = cos_p * cos_t
        p1 = sin_p * cos_t
        p2 = sin_t * jnp.ones_like(cos_p)
    return jnp.stack([p0, p1, p2], axis=0).astype(jnp.float32)


# --------------------------------------------------------------------- kernel
def _epc_kernel(d_ref, ct_ref, st_ref, cp_ref, sp_ref, o_ref, *, yz_swap):
    # d_ref : (TB, TH, W)     depth rows for TB batch elements (native dtype)
    # ct/st : (TH, 1) f32     cos(theta), sin(theta) per row
    # cp/sp : (1, W)  f32     cos(phi), sin(phi) per column
    # o_ref : (TB, 3, TH, W)  point-cloud channels for this (batch, H) tile
    d = d_ref[...].astype(jnp.float32)       # upcast in-register, math in f32
    ct = ct_ref[...]                         # (TH, 1) -> broadcasts over (TB, TH, W)
    st = st_ref[...]
    cp = cp_ref[...]                         # (1, W)  -> broadcasts over (TB, TH, W)
    sp = sp_ref[...]

    ctd = ct * d                             # reused by two channels
    odt = o_ref.dtype                        # cast on store (f32 or bf16)
    if yz_swap:
        o_ref[:, 0, :, :] = (cp * ctd).astype(odt)
        o_ref[:, 1, :, :] = (-(st * d)).astype(odt)
        o_ref[:, 2, :, :] = (sp * ctd).astype(odt)
    else:
        o_ref[:, 0, :, :] = (cp * ctd).astype(odt)
        o_ref[:, 1, :, :] = (sp * ctd).astype(odt)
        o_ref[:, 2, :, :] = (st * d).astype(odt)


# --------------------------------------------------------------- tile choices
_VMEM_LIMIT_BYTES = 32 * 1024 * 1024   # explicit raise; safe on v5e/v6e/v7x


def _vmem_budget_bytes():
    # v7x-class (64 MiB VMEM / TC, ~3.2 TB/s HBM): bigger steps amortize the
    # fixed per-step pipeline cost.  v5e/v6e: 12 MiB is already >=85% of the
    # HBM roofline and leaves headroom for neighbouring fusions.
    try:
        if int(pltpu.get_tpu_info().vmem_capacity_bytes) <= 64 * 1024 * 1024:
            return 24 * 1024 * 1024
    except Exception:
        pass
    return 12 * 1024 * 1024


def _choose_tiles(B, H, W, in_bytes, out_bytes, budget, tile_h=None):
    # Double-buffered footprint per (row, batch-elem): 1 depth read + 3 channels out.
    row_bytes = 2 * W * (in_bytes + 3 * out_bytes)
    if tile_h is not None:
        th = int(tile_h)
    elif H * row_bytes <= budget:
        th = H
    else:
        th = min(H, max(8, (budget // row_bytes) // 8 * 8))   # keep (8,128) rule
    # Fold batch elements into the block when per-step I/O would otherwise be
    # small (each grid step costs ~0.35 us of fixed overhead).
    tb = int(max(1, min(B, budget // max(1, th * row_bytes))))
    return th, tb


def _even_grid_adjust(B, H, th, tb):
    # v7x megacore: the two TensorCores shard the "parallel" grid axes; an odd
    # grid leaves one core idle for the tail step.  Prefer an even grid when a
    # block can be split without shrinking the DMA much.
    n_h, n_b = pl.cdiv(H, th), pl.cdiv(B, tb)
    if (n_h * n_b) % 2 == 0 or n_h * n_b == 1:
        return th, tb
    if tb > 1:
        tb2 = (tb + 1) // 2
        if pl.cdiv(B, tb2) % 2 == 0:
            return th, tb2
    if th > 8:
        th2 = max(8, (((th + 1) // 2) + 7) // 8 * 8)
        if th2 < th and pl.cdiv(H, th2) % 2 == 0:
            return th2, tb
    return th, tb


# -------------------------------------------------------------------- wrapper
def epc_forward(batch, YZ_swap=False, out_dtype=jnp.float32, tile_h=None):
    """batch: (B, H, W) euclidean depth.  Returns (B, 3, H, W) point cloud.

    out_dtype=jnp.float32 matches the PyTorch module; jnp.bfloat16 halves the
    dominant HBM write traffic (cast on store) if downstream tolerates it.
    The multiply itself always happens in f32.
    """
    B, H, W = batch.shape
    cos_t, sin_t, cos_p, sin_p = _trig_tables(H, W)

    # Lane-dense output: W not a multiple of 128 forces masked vst.msk partial
    # stores.  Pad W only when the padding overhead is small (<= 25%); padded
    # depth/trig columns are zero and the padded output columns are sliced off.
    # For small W the extra HBM bytes would outweigh the masked-store penalty.
    W_pad = ((W + 127) // 128) * 128
    do_pad = (W % 128 != 0) and (4 * W_pad <= 5 * W)
    if do_pad:
        batch = jnp.pad(batch, ((0, 0), (0, 0), (0, W_pad - W)))
        cos_p = jnp.pad(cos_p, ((0, 0), (0, W_pad - W)))
        sin_p = jnp.pad(sin_p, ((0, 0), (0, W_pad - W)))
        Wk = W_pad
    else:
        Wk = W

    in_bytes = jnp.dtype(batch.dtype).itemsize
    out_bytes = jnp.dtype(out_dtype).itemsize
    th, tb = _choose_tiles(B, H, Wk, in_bytes, out_bytes, _vmem_budget_bytes(), tile_h)
    th, tb = _even_grid_adjust(B, H, th, tb)
    n_h, n_b = pl.cdiv(H, th), pl.cdiv(B, tb)

    # Purely HBM-bound: depth read + 3-channel write dominate; trig is noise.
    cost = pl.CostEstimate(
        flops=4 * B * H * Wk,
        transcendentals=0,
        bytes_accessed=B * H * Wk * (in_bytes + 3 * out_bytes) + 8 * (H + Wk),
    )

    kernel = functools.partial(_epc_kernel, yz_swap=bool(YZ_swap))

    out = pl.pallas_call(
        kernel,
        out_shape=jax.ShapeDtypeStruct((B, 3, H, Wk), out_dtype),
        grid_spec=pltpu.PrefetchScalarGridSpec(
            num_scalar_prefetch=0,
            # H-tiles outer, batch blocks inner: per-row trig blocks keep the
            # same block index across consecutive batch steps -> DMA'd once per
            # H tile.  Both axes are fully independent -> "parallel".
            grid=(n_h, n_b),
            in_specs=[
                pl.BlockSpec((tb, th, Wk), lambda h, b: (b, h, 0)),   # depth
                pl.BlockSpec((th, 1), lambda h, b: (h, 0)),           # cos(theta)
                pl.BlockSpec((th, 1), lambda h, b: (h, 0)),           # sin(theta)
                pl.BlockSpec((1, Wk), lambda h, b: (0, 0)),           # cos(phi)
                pl.BlockSpec((1, Wk), lambda h, b: (0, 0)),           # sin(phi)
            ],
            out_specs=pl.BlockSpec((tb, 3, th, Wk), lambda h, b: (b, 0, h, 0)),
        ),
        compiler_params=pltpu.CompilerParams(
            dimension_semantics=("parallel", "parallel"),
            vmem_limit_bytes=_VMEM_LIMIT_BYTES,
        ),
        cost_estimate=cost,
    )(batch, cos_t, sin_t, cos_p, sin_p)

    if do_pad:
        out = out[..., :W]
    return out


if __name__ == "__main__":
    key = jax.random.PRNGKey(0)
    k1, k2, k3, k4 = jax.random.split(key, 4)

    # Case 1: module-scale smoke test (single grid step, batch folded), f32.
    B, H, W = 2, 16, 16
    depth = jax.random.uniform(k1, (B, H, W), dtype=jnp.float32, minval=0.5, maxval=5.0)
    out = jax.block_until_ready(epc_forward(depth))
    ref = depth[:, None, :, :] * xyz_sphere(H, W)[None]
    assert out.shape == (B, 3, H, W) and out.dtype == jnp.float32, (out.shape, out.dtype)
    np.testing.assert_allclose(np.asarray(out), np.asarray(ref), rtol=1e-6, atol=1e-6)

    # Case 2: H-tiled, lane-dense (W = 2*128) pipeline path with forced tile_h.
    B2, H2, W2 = 2, 32, 256
    depth2 = jax.random.uniform(k2, (B2, H2, W2), dtype=jnp.float32, minval=0.5, maxval=5.0)
    out2 = jax.block_until_ready(epc_forward(depth2, tile_h=8))
    ref2 = depth2[:, None, :, :] * xyz_sphere(H2, W2)[None]
    assert out2.shape == (B2, 3, H2, W2), out2.shape
    np.testing.assert_allclose(np.asarray(out2), np.asarray(ref2), rtol=1e-6, atol=1e-6)

    # Case 3: bf16 depth in / bf16 out (no wrapper upcast; f32 math in-kernel).
    depth3 = jax.random.uniform(k3, (B2, H2, W2), dtype=jnp.float32,
                                minval=0.5, maxval=5.0).astype(jnp.bfloat16)
    out3 = jax.block_until_ready(epc_forward(depth3, out_dtype=jnp.bfloat16))
    ref3 = depth3.astype(jnp.float32)[:, None, :, :] * xyz_sphere(H2, W2)[None]
    assert out3.dtype == jnp.bfloat16, out3.dtype
    np.testing.assert_allclose(np.asarray(out3, dtype=np.float32), np.asarray(ref3),
                               rtol=2e-2, atol=2e-2)

    # Case 4: W not a multiple of 128 -> lane-padded path (240 -> 256, sliced back).
    B4, H4, W4 = 2, 16, 240
    depth4 = jax.random.uniform(k4, (B4, H4, W4), dtype=jnp.float32, minval=0.5, maxval=5.0)
    out4 = jax.block_until_ready(epc_forward(depth4))
    ref4 = depth4[:, None, :, :] * xyz_sphere(H4, W4)[None]
    assert out4.shape == (B4, 3, H4, W4), out4.shape
    np.testing.assert_allclose(np.asarray(out4), np.asarray(ref4), rtol=1e-6, atol=1e-6)

    print("KERNEL_OK")
</pallas_src>

<mosaic_0001>
module attributes {stable_mosaic.version = 11 : i64} {
  func.func @_epc_kernel(%arg0: i32, %arg1: i32, %arg2: memref<2x16x16xf32, #tpu.memory_space<vmem>>, %arg3: memref<16x1xf32, #tpu.memory_space<vmem>>, %arg4: memref<16x1xf32, #tpu.memory_space<vmem>>, %arg5: memref<1x16xf32, #tpu.memory_space<vmem>>, %arg6: memref<1x16xf32, #tpu.memory_space<vmem>>, %arg7: memref<2x3x16x16xf32, #tpu.memory_space<vmem>>) attributes {dimension_semantics = [#tpu.dimension_semantics<parallel>, #tpu.dimension_semantics<parallel>], iteration_bounds = array<i64: 1, 1>, scalar_prefetch = 0 : i64, scratch_operands = 0 : i64, tpu.core_type = #tpu.core_type<tc>, window_params = [{transform_indices = @transform_0, window_bounds = array<i64: 2, 16, 16>}, {transform_indices = @transform_1, window_bounds = array<i64: 16, 1>}, {transform_indices = @transform_2, window_bounds = array<i64: 16, 1>}, {pipeline_mode = #tpu.pipeline_mode<synchronous>, transform_indices = @transform_3, window_bounds = array<i64: 1, 16>}, {pipeline_mode = #tpu.pipeline_mode<synchronous>, transform_indices = @transform_4, window_bounds = array<i64: 1, 16>}, {transform_indices = @transform_5, window_bounds = array<i64: 2, 3, 16, 16>}]} {
    %c0 = arith.constant 0 : index
    %c0_0 = arith.constant 0 : index
    %c0_1 = arith.constant 0 : index
    %0 = vector.load %arg2[%c0, %c0_0, %c0_1] : memref<2x16x16xf32, #tpu.memory_space<vmem>>, vector<2x16x16xf32>
    %c0_2 = arith.constant 0 : index
    %c0_3 = arith.constant 0 : index
    %1 = vector.load %arg3[%c0_2, %c0_3] : memref<16x1xf32, #tpu.memory_space<vmem>>, vector<16x1xf32>
    %c0_4 = arith.constant 0 : index
    %c0_5 = arith.constant 0 : index
    %2 = vector.load %arg4[%c0_4, %c0_5] : memref<16x1xf32, #tpu.memory_space<vmem>>, vector<16x1xf32>
    %c0_6 = arith.constant 0 : index
    %c0_7 = arith.constant 0 : index
    %3 = vector.load %arg5[%c0_6, %c0_7] : memref<1x16xf32, #tpu.memory_space<vmem>>, vector<1x16xf32>
    %c0_8 = arith.constant 0 : index
    %c0_9 = arith.constant 0 : index
    %4 = vector.load %arg6[%c0_8, %c0_9] : memref<1x16xf32, #tpu.memory_space<vmem>>, vector<1x16xf32>
    %5 = vector.shape_cast %1 : vector<16x1xf32> to vector<1x16x1xf32>
    %6 = vector.broadcast %5 : vector<1x16x1xf32> to vector<2x16x16xf32>
    %7 = arith.mulf %6, %0 : vector<2x16x16xf32>
    %8 = vector.shape_cast %3 : vector<1x16xf32> to vector<1x1x16xf32>
    %9 = vector.broadcast %8 : vector<1x1x16xf32> to vector<2x16x16xf32>
    %10 = arith.mulf %9, %7 : vector<2x16x16xf32>
    %c0_10 = arith.constant 0 : index
    %c0_11 = arith.constant 0 : index
    %c0_12 = arith.constant 0 : index
    %c0_13 = arith.constant 0 : index
    %11 = vector.load %arg7[%c0_10, %c0_11, %c0_12, %c0_13] : memref<2x3x16x16xf32, #tpu.memory_space<vmem>>, vector<2x1x16x16xf32>
    %12 = vector.shape_cast %11 : vector<2x1x16x16xf32> to vector<2x16x16xf32>
    %13 = vector.shape_cast %10 : vector<2x16x16xf32> to vector<2x1x16x16xf32>
    tpu.vector_store %arg7[%c0_10, %c0_11, %c0_12, %c0_13], %13 {strides = array<i32>} : memref<2x3x16x16xf32, #tpu.memory_space<vmem>>, vector<2x1x16x16xf32>,
    %14 = vector.shape_cast %4 : vector<1x16xf32> to vector<1x1x16xf32>
    %15 = vector.broadcast %14 : vector<1x1x16xf32> to vector<2x16x16xf32>
    %16 = arith.mulf %15, %7 : vector<2x16x16xf32>
    %c0_14 = arith.constant 0 : index
    %c1 = arith.constant 1 : index
    %c0_15 = arith.constant 0 : index
    %c0_16 = arith.constant 0 : index
    %17 = vector.load %arg7[%c0_14, %c1, %c0_15, %c0_16] : memref<2x3x16x16xf32, #tpu.memory_space<vmem>>, vector<2x1x16x16xf32>
    %18 = vector.shape_cast %17 : vector<2x1x16x16xf32> to vector<2x16x16xf32>
    %19 = vector.shape_cast %16 : vector<2x16x16xf32> to vector<2x1x16x16xf32>
    tpu.vector_store %arg7[%c0_14, %c1, %c0_15, %c0_16], %19 {strides = array<i32>} : memref<2x3x16x16xf32, #tpu.memory_space<vmem>>, vector<2x1x16x16xf32>,
    %20 = vector.shape_cast %2 : vector<16x1xf32> to vector<1x16x1xf32>
    %21 = vector.broadcast %20 : vector<1x16x1xf32> to vector<2x16x16xf32>
    %22 = arith.mulf %21, %0 : vector<2x16x16xf32>
    %c0_17 = arith.constant 0 : index
    %c2 = arith.constant 2 : index
    %c0_18 = arith.constant 0 : index
    %c0_19 = arith.constant 0 : index
    %23 = vector.load %arg7[%c0_17, %c2, %c0_18, %c0_19] : memref<2x3x16x16xf32, #tpu.memory_space<vmem>>, vector<2x1x16x16xf32>
    %24 = vector.shape_cast %23 : vector<2x1x16x16xf32> to vector<2x16x16xf32>
    %25 = vector.shape_cast %22 : vector<2x16x16xf32> to vector<2x1x16x16xf32>
    tpu.vector_store %arg7[%c0_17, %c2, %c0_18, %c0_19], %25 {strides = array<i32>} : memref<2x3x16x16xf32, #tpu.memory_space<vmem>>, vector<2x1x16x16xf32>,
    return
  }
  func.func @transform_0(%arg0: i32, %arg1: i32) -> (i32, i32, i32) {
    %c0_i32 = arith.constant 0 : i32
    %c0_i32_0 = arith.constant 0 : i32
    return %arg1, %arg0, %c0_i32 : i32, i32, i32
  }
  func.func @transform_1(%arg0: i32, %arg1: i32) -> (i32, i32) {
    %c0_i32 = arith.constant 0 : i32
    %c0_i32_0 = arith.constant 0 : i32
    return %arg0, %c0_i32 : i32, i32
  }
  func.func @transform_2(%arg0: i32, %arg1: i32) -> (i32, i32) {
    %c0_i32 = arith.constant 0 : i32
    %c0_i32_0 = arith.constant 0 : i32
    return %arg0, %c0_i32 : i32, i32
  }
  func.func @transform_3(%arg0: i32, %arg1: i32) -> (i32, i32) {
    %c0_i32 = arith.constant 0 : i32
    %c0_i32_0 = arith.constant 0 : i32
    %c0_i32_1 = arith.constant 0 : i32
    return %c0_i32, %c0_i32_0 : i32, i32
  }
  func.func @transform_4(%arg0: i32, %arg1: i32) -> (i32, i32) {
    %c0_i32 = arith.constant 0 : i32
    %c0_i32_0 = arith.constant 0 : i32
    %c0_i32_1 = arith.constant 0 : i32
    return %c0_i32, %c0_i32_0 : i32, i32
  }
  func.func @transform_5(%arg0: i32, %arg1: i32) -> (i32, i32, i32, i32) {
    %c0_i32 = arith.constant 0 : i32
    %c0_i32_0 = arith.constant 0 : i32
    %c0_i32_1 = arith.constant 0 : i32
    return %arg1, %c0_i32, %arg0, %c0_i32_0 : i32, i32, i32, i32
  }
}

</mosaic_0001>

<llo_original>
// kernel: tpu_custom_call.1
$region0: #{tpu_custom_call.1}
  #allocation0 [shape = 'u32[]', space=smem, size = 0x4, offset = 0x4, fixed_abs, tag = 'smem constant byte address 0x4 - core index']
  #allocation1 [shape = 'u32[144,128]{1,0:T(1,128)}', space=vmem, size = 0x12000, scoped, tag = 'internal scratch']
  %s0 = inlined_call_operand.vmem [shape: f32[2,16,16], index: 0, kind: input, shape index: {}]
  %s1 = inlined_call_operand.vmem [shape: f32[16,1], index: 1, kind: input, shape index: {}]
  %s2 = inlined_call_operand.vmem [shape: f32[16,1], index: 2, kind: input, shape index: {}]
  %s3 = inlined_call_operand.vmem [shape: f32[1,16], index: 3, kind: input, shape index: {}]
  %s4 = inlined_call_operand.vmem [shape: f32[1,16], index: 4, kind: input, shape index: {}]
  %s5 = inlined_call_operand.hbm [shape: f32[2,3,16,16], index: 5, kind: output, shape index: {}]
  %s6 = sld [smem:[#allocation0]]
  $region30: #{tpu_custom_call.1} parent=0
    _
  %s8 = ssub.s32 1, %s6
  %s9 = scalar_select 0, %s8, %s6
  $region1: #{tpu_custom_call.1} parent=0
    #allocation2 [shape = 'u8[49152]{0}', space=vmem, size = 0xc000, scoped, tag = 'output window, operand 0, single buffered']
    #allocation3 [shape = 's32[1]{0}', space=sflag, size = 0x4, scoped, tag = 'scoped memory for tpu_custom_call.1']
    %10 = vsyncpa [#allocation3], 0
    // Predicated region
    $region2: #{tpu_custom_call.1} parent=1 // pred_check
      _
    $region3: #{tpu_custom_call.1} parent=1 // pred_check_branch
      %12 = sbr.rel (0) target = $region5
    $region4: #{tpu_custom_call.1} parent=1 // pred_region
      _
    $region5: #{tpu_custom_call.1} parent=1 // pred_fallthru
      _
    // Predicated region
    $region6: #{tpu_custom_call.1} parent=1 // pred_check
      _
    $region7: #{tpu_custom_call.1} parent=1 // pred_check_branch
      %14 = sbr.rel (0) target = $region9
    $region8: #{tpu_custom_call.1} parent=1 // pred_region
      _
    $region9: #{tpu_custom_call.1} parent=1 // pred_fallthru
      _
    // Predicated region
    $region10: #{tpu_custom_call.1} parent=1 // pred_check
      _
    $region11: #{tpu_custom_call.1} parent=1 // pred_check_branch
      %16 = sbr.rel (0) target = $region13
    $region12: #{tpu_custom_call.1} parent=1 // pred_region
      _
    $region13: #{tpu_custom_call.1} parent=1 // pred_fallthru
      _
    // Predicated region
    $region14: #{tpu_custom_call.1} parent=1 // pred_check
      _
    $region15: #{tpu_custom_call.1} parent=1 // pred_check_branch
      %18 = sbr.rel (0) target = $region17
    $region16: #{tpu_custom_call.1} parent=1 // pred_region
      _
    $region17: #{tpu_custom_call.1} parent=1 // pred_fallthru
      _
    // Predicated region
    $region18: #{tpu_custom_call.1} parent=1 // pred_check
      _
    $region19: #{tpu_custom_call.1} parent=1 // pred_check_branch
      %20 = sbr.rel (0) target = $region21
    $region20: #{tpu_custom_call.1} parent=1 // pred_region
      _
    $region21: #{tpu_custom_call.1} parent=1 // pred_fallthru
      _
    %v21 = vld [vmem:[%s0] sm:$0xff]
    %v22 = vld [vmem:[%s0 + $0x8] sm:$0xff]
    %v23 = vld [vmem:[%s0 + $0x10] sm:$0xff]
    %v24 = vld [vmem:[%s0 + $0x18] sm:$0xff]
    %v25 = vld [vmem:[%s1] sm:$0xff]
    %v26 = vld [vmem:[%s1 + $0x8] sm:$0xff]
    %v27 = vld [vmem:[%s2] sm:$0xff]
    %v28 = vld [vmem:[%s2 + $0x8] sm:$0xff]
    %v29 = vld [vmem:[%s3] sm:$0x1]
    %v30 = vld [vmem:[%s4] sm:$0x1]
    %32 = vset.pattern.permute.xlu0 0
    %33 = vperm.xlu0 %32, %v25
    %v34 = vpop.permute.xlu0 %33
    %37 = vset.pattern.permute.xlu0 0
    %38 = vperm.xlu0 %37, %v26
    %v39 = vpop.permute.xlu0 %38
    %v41 = vmul.f32 %v34, %v21
    %v42 = vmul.f32 %v39, %v22
    %v43 = vmul.f32 %v34, %v23
    %v44 = vmul.f32 %v39, %v24
    %v46 = vlaneseq
    %v47 = vshrl.u32 %v46, 7
    %v48 = vsub.s32 0, %v47
    %v49 = vrot.slane %v29, %v48
    %v51 = vmul.f32 %v49, %v41
    %v52 = vmul.f32 %v49, %v42
    %v53 = vmul.f32 %v49, %v43
    %v54 = vmul.f32 %v49, %v44
    %vm55 = vcmask 130048
    %56 = vst.msk [vmem:[#allocation2] sm:$0xff] %vm55, %v51
    %57 = vst.msk [vmem:[#allocation2 + $0x8] sm:$0xff] %vm55, %v52
    %58 = vst.msk [vmem:[#allocation2 + $0x30] sm:$0xff] %vm55, %v53
    %59 = vst.msk [vmem:[#allocation2 + $0x38] sm:$0xff] %vm55, %v54
    %v61 = vlaneseq
    %v62 = vshrl.u32 %v61, 7
    %v63 = vsub.s32 0, %v62
    %v64 = vrot.slane %v30, %v63
    %v66 = vmul.f32 %v64, %v41
    %v67 = vmul.f32 %v64, %v42
    %v68 = vmul.f32 %v64, %v43
    %v69 = vmul.f32 %v64, %v44
    %s70 = scalar_lea.vmem [#allocation2], 16
    %71 = vst.msk [vmem:[%s70] sm:$0xff] %vm55, %v66
    %72 = vst.msk [vmem:[%s70 + $0x8] sm:$0xff] %vm55, %v67
    %73 = vst.msk [vmem:[%s70 + $0x30] sm:$0xff] %vm55, %v68
    %74 = vst.msk [vmem:[%s70 + $0x38] sm:$0xff] %vm55, %v69
    %76 = vset.pattern.permute.xlu0 0
    %77 = vperm.xlu0 %76, %v27
    %v78 = vpop.permute.xlu0 %77
    %81 = vset.pattern.permute.xlu0 0
    %82 = vperm.xlu0 %81, %v28
    %v83 = vpop.permute.xlu0 %82
    %v85 = vmul.f32 %v78, %v21
    %v86 = vmul.f32 %v83, %v22
    %v87 = vmul.f32 %v78, %v23
    %v88 = vmul.f32 %v83, %v24
    %s89 = scalar_lea.vmem [#allocation2], 32
    %90 = vst.msk [vmem:[%s89] sm:$0xff] %vm55, %v85
    %91 = vst.msk [vmem:[%s89 + $0x8] sm:$0xff] %vm55, %v86
    %92 = vst.msk [vmem:[%s89 + $0x30] sm:$0xff] %vm55, %v87
    %93 = vst.msk [vmem:[%s89 + $0x38] sm:$0xff] %vm55, %v88
    // Predicated region
    $region22: #{tpu_custom_call.1} parent=1 // pred_check
      _
    $region23: #{tpu_custom_call.1} parent=1 // pred_check_branch
      %95 = sbr.rel (0) target = $region25
    $region24: #{tpu_custom_call.1} parent=1 // pred_region
      %s97 = ssub.s32 1536, 1536
      %98 = vsyncadd [#allocation3], %s97
      %s99 = sshll.u32 [#allocation2], 4
      %s100 = int_to_ptr.vmem [resolvable:$true] %s99
      %105 = dma.vmem_to_hbm [thread:$0]  %s100, 1536, %s5, [#allocation3], 128, 128, 8
    $region25: #{tpu_custom_call.1} parent=1 // pred_fallthru
      _
    // Predicated region
    $region26: #{tpu_custom_call.1} parent=1 // pred_check
      _
    $region27: #{tpu_custom_call.1} parent=1 // pred_check_branch
      %107 = sbr.rel (0) target = $region29
    $region28: #{tpu_custom_call.1} parent=1 // pred_region
      %108 = dma.done [#allocation3], 1536
    $region29: #{tpu_custom_call.1} parent=1 // pred_fallthru
      _
    %109 = vsyncpa [#allocation3], 1

</llo_original>
